<compile_context>
chip_gen: v5e
topology: v5e:2x2
jax: 0.10.0
libtpu: 0.0.40
codegen_flags: <defaults>
</compile_context>

<pallas_src>
import functools
import math

import jax
import jax.numpy as jnp
from jax import lax
from jax.experimental import pallas as pl
from jax.experimental.pallas import tpu as pltpu

_LANE = 128
_SUBLANE = 8


def _round_up(n, m):
    return ((n + m - 1) // m) * m


def _flash_attn_kernel(x_q_ref, x_kv_ref, wqkv_ref, out_ref,
                       q_sc, m_sc, l_sc, acc_sc,
                       *, seq, tk, d_out_p, need_mask):
    kv = pl.program_id(1)

    @pl.when(kv == 0)
    def _():
        # Project q once per q tile; the 1/sqrt(d_out) scale is already folded
        # into the W_q columns of the fused weight.
        q_sc[...] = jnp.dot(
            x_q_ref[...], wqkv_ref[:, :d_out_p],
            preferred_element_type=jnp.float32).astype(q_sc.dtype)
        m_sc[...] = jnp.full_like(m_sc, -jnp.inf)
        l_sc[...] = jnp.zeros_like(l_sc)
        acc_sc[...] = jnp.zeros_like(acc_sc)

    # Project k and v for this kv tile with one MXU matmul; slices are at
    # 128-lane-aligned column offsets so they are free views.
    kvp = jnp.dot(x_kv_ref[...], wqkv_ref[:, d_out_p:],
                  preferred_element_type=jnp.float32)
    k = kvp[:, :d_out_p].astype(jnp.bfloat16)
    v = kvp[:, d_out_p:].astype(jnp.bfloat16)

    # scores (tq, tk): contract the last dims of q and k — no k.T copy (no XLU).
    s = lax.dot_general(
        q_sc[...], k,
        dimension_numbers=(((1,), (1,)), ((), ())),
        preferred_element_type=jnp.float32)

    if need_mask:  # trace-time constant: only emitted when seq was padded
        key_idx = kv * tk + lax.broadcasted_iota(jnp.int32, s.shape, 1)
        s = jnp.where(key_idx < seq, s, -jnp.inf)

    # Online softmax update — all statistics in f32.
    m_prev = m_sc[...]
    m_new = jnp.maximum(m_prev, jnp.max(s, axis=-1, keepdims=True))
    alpha = jnp.exp(m_prev - m_new)
    p = jnp.exp(s - m_new)
    l_sc[...] = alpha * l_sc[...] + jnp.sum(p, axis=-1, keepdims=True)
    acc_sc[...] = alpha * acc_sc[...] + jnp.dot(
        p.astype(jnp.bfloat16), v, preferred_element_type=jnp.float32)
    m_sc[...] = m_new

    @pl.when(kv == pl.num_programs(1) - 1)
    def _():
        # Deferred normalization: one approximate reciprocal (EUP vrcp, free
        # slot) applied to the (tq, d_out_p) accumulator.
        inv_l = pl.reciprocal(l_sc[...], approx=True)
        out_ref[...] = (acc_sc[...] * inv_l).astype(out_ref.dtype)


def self_attention_v2(x, w_query, w_key, w_value):
    """x: (seq, d_in) f32; w_*: nn.Linear weights of shape (d_out, d_in), no bias."""
    seq, d_in = x.shape
    d_out = w_query.shape[0]

    # Lane/sublane-aligned padded sizes.
    d_in_p = _round_up(d_in, _LANE)
    d_out_p = _round_up(d_out, _LANE)
    t = _LANE if seq >= _LANE else _round_up(seq, _SUBLANE)
    tq = tk = t
    seq_p = _round_up(seq, t)

    # Fused, pre-transposed projection weight (d_in_p, 3*d_out_p) in bf16.
    # Softmax scale is folded into W_q (weight-side constant, const-folded).
    scale = 1.0 / math.sqrt(d_out)

    def _pad_w(w):  # (d_in, d_out) -> (d_in_p, d_out_p), zero padded
        return jnp.pad(w, ((0, d_in_p - d_in), (0, d_out_p - d_out)))

    w_qkv = jnp.concatenate(
        [_pad_w(w_query.T * scale), _pad_w(w_key.T), _pad_w(w_value.T)],
        axis=1).astype(jnp.bfloat16)

    x_p = jnp.pad(x, ((0, seq_p - seq), (0, d_in_p - d_in))).astype(jnp.bfloat16)

    kernel = functools.partial(
        _flash_attn_kernel,
        seq=seq, tk=tk, d_out_p=d_out_p, need_mask=(seq_p != seq))

    grid = (seq_p // tq, seq_p // tk)

    out_p = pl.pallas_call(
        kernel,
        out_shape=jax.ShapeDtypeStruct((seq_p, d_out_p), jnp.float32),
        grid_spec=pltpu.PrefetchScalarGridSpec(
            num_scalar_prefetch=0,
            grid=grid,
            in_specs=[
                # x rows for the q tile (varies with the parallel axis only)
                pl.BlockSpec((tq, d_in_p), lambda qi, ki: (qi, 0)),
                # x rows for the k/v tile (varies with the kv axis only)
                pl.BlockSpec((tk, d_in_p), lambda qi, ki: (ki, 0)),
                # Fused W_qkv: same block every step -> DMA'd once, VMEM-resident.
                pl.BlockSpec((d_in_p, 3 * d_out_p), lambda qi, ki: (0, 0)),
            ],
            out_specs=pl.BlockSpec((tq, d_out_p), lambda qi, ki: (qi, 0)),
            scratch_shapes=[
                pltpu.VMEM((tq, d_out_p), jnp.bfloat16),   # cached q tile
                pltpu.VMEM((tq, 1), jnp.float32),          # running max
                pltpu.VMEM((tq, 1), jnp.float32),          # running denom
                pltpu.VMEM((tq, d_out_p), jnp.float32),    # output accumulator
            ]),
        compiler_params=pltpu.CompilerParams(
            dimension_semantics=("parallel", "arbitrary"),
            vmem_limit_bytes=32 * 1024 * 1024),
    )(x_p, x_p, w_qkv)

    # Strip lane/row padding back to the module's output shape.
    return out_p[:seq, :d_out]


def _reference(x, w_query, w_key, w_value):
    """Pure-JAX (f32) reference mirroring the PyTorch forward pass."""
    keys = x @ w_key.T
    queries = x @ w_query.T
    values = x @ w_value.T
    attn_scores = queries @ keys.T
    attn_weights = jax.nn.softmax(attn_scores / (keys.shape[-1] ** 0.5), axis=1)
    return attn_weights @ values


def _run_case(key, seq, d_in, d_out):
    kx, kq, kk, kv = jax.random.split(key, 4)
    x = jax.random.normal(kx, (seq, d_in), dtype=jnp.float32)
    bound = 1.0 / (d_in ** 0.5)   # nn.Linear default init range, shape (d_out, d_in)
    w_query = jax.random.uniform(kq, (d_out, d_in), jnp.float32, -bound, bound)
    w_key = jax.random.uniform(kk, (d_out, d_in), jnp.float32, -bound, bound)
    w_value = jax.random.uniform(kv, (d_out, d_in), jnp.float32, -bound, bound)

    out = jax.block_until_ready(self_attention_v2(x, w_query, w_key, w_value))
    ref = _reference(x, w_query, w_key, w_value)
    assert out.shape == (seq, d_out)
    # bf16 MXU operands (x, W_qkv, k, probs) + approximate EUP reciprocal:
    # expect ~1e-2 level absolute agreement with the f32 reference.
    assert jnp.allclose(out, ref, atol=3e-2, rtol=3e-2), \
        f"mismatch vs reference (seq={seq}, d_in={d_in}, d_out={d_out})"


if __name__ == "__main__":
    key = jax.random.PRNGKey(0)
    k1, k2 = jax.random.split(key)

    # Small single-tile case (grid 1x1, no padding along seq).
    _run_case(k1, seq=8, d_in=32, d_out=16)
    # Multi-tile case exercising the online softmax across kv tiles, the
    # "parallel" q axis, and the padded-key mask (seq not a tile multiple).
    _run_case(k2, seq=200, d_in=64, d_out=32)

    print("KERNEL_OK")
</pallas_src>

<mosaic_0001>
module attributes {stable_mosaic.version = 11 : i64} {
  func.func @_flash_attn_kernel(%arg0: i32, %arg1: i32, %arg2: memref<8x128xbf16, #tpu.memory_space<vmem>>, %arg3: memref<8x128xbf16, #tpu.memory_space<vmem>>, %arg4: memref<128x384xbf16, #tpu.memory_space<vmem>>, %arg5: memref<8x128xf32, #tpu.memory_space<vmem>>, %arg6: memref<8x128xbf16, #tpu.memory_space<vmem>>, %arg7: memref<8x1xf32, #tpu.memory_space<vmem>>, %arg8: memref<8x1xf32, #tpu.memory_space<vmem>>, %arg9: memref<8x128xf32, #tpu.memory_space<vmem>>) attributes {dimension_semantics = [#tpu.dimension_semantics<parallel>, #tpu.dimension_semantics<arbitrary>], iteration_bounds = array<i64: 1, 1>, scalar_prefetch = 0 : i64, scratch_operands = 4 : i64, tpu.core_type = #tpu.core_type<tc>, window_params = [{transform_indices = @transform_0, window_bounds = array<i64: 8, 128>}, {transform_indices = @transform_1, window_bounds = array<i64: 8, 128>}, {pipeline_mode = #tpu.pipeline_mode<synchronous>, transform_indices = @transform_2, window_bounds = array<i64: 128, 384>}, {transform_indices = @transform_3, window_bounds = array<i64: 8, 128>}]} {
    %c0_i32 = arith.constant 0 : i32
    %0 = arith.cmpi eq, %arg1, %c0_i32 : i32
    %1 = arith.extui %0 : i1 to i32
    %c0_i32_0 = arith.constant 0 : i32
    %2 = arith.cmpi ne, %1, %c0_i32_0 : i32
    scf.if %2 {
      %c0_23 = arith.constant 0 : index
      %c0_24 = arith.constant 0 : index
      %38 = vector.load %arg2[%c0_23, %c0_24] : memref<8x128xbf16, #tpu.memory_space<vmem>>, vector<8x128xbf16>
      %c0_25 = arith.constant 0 : index
      %c0_26 = arith.constant 0 : index
      %39 = vector.load %arg4[%c0_25, %c0_26] : memref<128x384xbf16, #tpu.memory_space<vmem>>, vector<128x128xbf16>
      %cst_27 = arith.constant dense<0.000000e+00> : vector<8x128xf32>
      %40 = tpu.matmul %38, %39, %cst_27 {dimension_numbers = #tpu.dot_dimension_numbers<[1], [0], [0], [1], [0, 0, 1, 1], [], []>} : vector<8x128xbf16>, vector<128x128xbf16>, vector<8x128xf32> -> vector<8x128xf32>
      %41 = arith.truncf %40 : vector<8x128xf32> to vector<8x128xbf16>
      %c0_28 = arith.constant 0 : index
      %c0_29 = arith.constant 0 : index
      %42 = vector.load %arg6[%c0_28, %c0_29] : memref<8x128xbf16, #tpu.memory_space<vmem>>, vector<8x128xbf16>
      tpu.vector_store %arg6[%c0_28, %c0_29], %41 {strides = array<i32>} : memref<8x128xbf16, #tpu.memory_space<vmem>>, vector<8x128xbf16>,
      %cst_30 = arith.constant 0xFF800000 : f32
      %43 = vector.broadcast %cst_30 : f32 to vector<8x1xf32>
      %c0_31 = arith.constant 0 : index
      %c0_32 = arith.constant 0 : index
      %44 = vector.load %arg7[%c0_31, %c0_32] : memref<8x1xf32, #tpu.memory_space<vmem>>, vector<8x1xf32>
      tpu.vector_store %arg7[%c0_31, %c0_32], %43 {strides = array<i32>} : memref<8x1xf32, #tpu.memory_space<vmem>>, vector<8x1xf32>,
      %cst_33 = arith.constant 0.000000e+00 : f32
      %45 = vector.broadcast %cst_33 : f32 to vector<8x1xf32>
      %c0_34 = arith.constant 0 : index
      %c0_35 = arith.constant 0 : index
      %46 = vector.load %arg8[%c0_34, %c0_35] : memref<8x1xf32, #tpu.memory_space<vmem>>, vector<8x1xf32>
      tpu.vector_store %arg8[%c0_34, %c0_35], %45 {strides = array<i32>} : memref<8x1xf32, #tpu.memory_space<vmem>>, vector<8x1xf32>,
      %cst_36 = arith.constant 0.000000e+00 : f32
      %47 = vector.broadcast %cst_36 : f32 to vector<8x128xf32>
      %c0_37 = arith.constant 0 : index
      %c0_38 = arith.constant 0 : index
      %48 = vector.load %arg9[%c0_37, %c0_38] : memref<8x128xf32, #tpu.memory_space<vmem>>, vector<8x128xf32>
      tpu.vector_store %arg9[%c0_37, %c0_38], %47 {strides = array<i32>} : memref<8x128xf32, #tpu.memory_space<vmem>>, vector<8x128xf32>,
    } else {
    }
    %c0 = arith.constant 0 : index
    %c0_1 = arith.constant 0 : index
    %3 = vector.load %arg3[%c0, %c0_1] : memref<8x128xbf16, #tpu.memory_space<vmem>>, vector<8x128xbf16>
    %c0_2 = arith.constant 0 : index
    %c128 = arith.constant 128 : index
    %4 = vector.load %arg4[%c0_2, %c128] : memref<128x384xbf16, #tpu.memory_space<vmem>>, vector<128x256xbf16>
    %cst = arith.constant dense<0.000000e+00> : vector<8x256xf32>
    %5 = tpu.matmul %3, %4, %cst {dimension_numbers = #tpu.dot_dimension_numbers<[1], [0], [0], [1], [0, 0, 1, 1], [], []>} : vector<8x128xbf16>, vector<128x256xbf16>, vector<8x256xf32> -> vector<8x256xf32>
    %6 = vector.extract_strided_slice %5 {offsets = [0, 0], sizes = [8, 128], strides = [1, 1]} : vector<8x256xf32> to vector<8x128xf32>
    %7 = arith.truncf %6 : vector<8x128xf32> to vector<8x128xbf16>
    %8 = vector.extract_strided_slice %5 {offsets = [0, 128], sizes = [8, 128], strides = [1, 1]} : vector<8x256xf32> to vector<8x128xf32>
    %9 = arith.truncf %8 : vector<8x128xf32> to vector<8x128xbf16>
    %c0_3 = arith.constant 0 : index
    %c0_4 = arith.constant 0 : index
    %10 = vector.load %arg6[%c0_3, %c0_4] : memref<8x128xbf16, #tpu.memory_space<vmem>>, vector<8x128xbf16>
    %cst_5 = arith.constant dense<0.000000e+00> : vector<8x8xf32>
    %11 = tpu.matmul %10, %7, %cst_5 {dimension_numbers = #tpu.dot_dimension_numbers<[1], [1], [0], [0], [0, 0, 1, 0], [], []>} : vector<8x128xbf16>, vector<8x128xbf16>, vector<8x8xf32> -> vector<8x8xf32>
    %c0_6 = arith.constant 0 : index
    %c0_7 = arith.constant 0 : index
    %12 = vector.load %arg7[%c0_6, %c0_7] : memref<8x1xf32, #tpu.memory_space<vmem>>, vector<8x1xf32>
    %cst_8 = arith.constant dense<0xFF800000> : vector<8xf32>
    %13 = vector.multi_reduction <maximumf>, %11, %cst_8 [1] : vector<8x8xf32> to vector<8xf32>
    %14 = vector.shape_cast %13 : vector<8xf32> to vector<8x1xf32>
    %15 = arith.maximumf %12, %14 : vector<8x1xf32>
    %16 = arith.subf %12, %15 : vector<8x1xf32>
    %17 = math.exp %16 : vector<8x1xf32>
    %18 = vector.broadcast %15 : vector<8x1xf32> to vector<8x8xf32>
    %19 = arith.subf %11, %18 : vector<8x8xf32>
    %20 = math.exp %19 : vector<8x8xf32>
    %c0_9 = arith.constant 0 : index
    %c0_10 = arith.constant 0 : index
    %21 = vector.load %arg8[%c0_9, %c0_10] : memref<8x1xf32, #tpu.memory_space<vmem>>, vector<8x1xf32>
    %22 = arith.mulf %17, %21 : vector<8x1xf32>
    %cst_11 = arith.constant dense<0.000000e+00> : vector<8xf32>
    %23 = vector.multi_reduction <add>, %20, %cst_11 [1] : vector<8x8xf32> to vector<8xf32>
    %24 = vector.shape_cast %23 : vector<8xf32> to vector<8x1xf32>
    %25 = arith.addf %22, %24 : vector<8x1xf32>
    %c0_12 = arith.constant 0 : index
    %c0_13 = arith.constant 0 : index
    %26 = vector.load %arg8[%c0_12, %c0_13] : memref<8x1xf32, #tpu.memory_space<vmem>>, vector<8x1xf32>
    tpu.vector_store %arg8[%c0_12, %c0_13], %25 {strides = array<i32>} : memref<8x1xf32, #tpu.memory_space<vmem>>, vector<8x1xf32>,
    %c0_14 = arith.constant 0 : index
    %c0_15 = arith.constant 0 : index
    %27 = vector.load %arg9[%c0_14, %c0_15] : memref<8x128xf32, #tpu.memory_space<vmem>>, vector<8x128xf32>
    %28 = vector.broadcast %17 : vector<8x1xf32> to vector<8x128xf32>
    %29 = arith.mulf %28, %27 : vector<8x128xf32>
    %30 = arith.truncf %20 : vector<8x8xf32> to vector<8x8xbf16>
    %cst_16 = arith.constant dense<0.000000e+00> : vector<8x128xf32>
    %31 = tpu.matmul %30, %9, %cst_16 {dimension_numbers = #tpu.dot_dimension_numbers<[1], [0], [0], [1], [0, 0, 1, 1], [], []>} : vector<8x8xbf16>, vector<8x128xbf16>, vector<8x128xf32> -> vector<8x128xf32>
    %32 = arith.addf %29, %31 : vector<8x128xf32>
    %c0_17 = arith.constant 0 : index
    %c0_18 = arith.constant 0 : index
    %33 = vector.load %arg9[%c0_17, %c0_18] : memref<8x128xf32, #tpu.memory_space<vmem>>, vector<8x128xf32>
    tpu.vector_store %arg9[%c0_17, %c0_18], %32 {strides = array<i32>} : memref<8x128xf32, #tpu.memory_space<vmem>>, vector<8x128xf32>,
    %c0_19 = arith.constant 0 : index
    %c0_20 = arith.constant 0 : index
    %34 = vector.load %arg7[%c0_19, %c0_20] : memref<8x1xf32, #tpu.memory_space<vmem>>, vector<8x1xf32>
    tpu.vector_store %arg7[%c0_19, %c0_20], %15 {strides = array<i32>} : memref<8x1xf32, #tpu.memory_space<vmem>>, vector<8x1xf32>,
    %c0_i32_21 = arith.constant 0 : i32
    %35 = arith.cmpi eq, %arg1, %c0_i32_21 : i32
    %36 = arith.extui %35 : i1 to i32
    %c0_i32_22 = arith.constant 0 : i32
    %37 = arith.cmpi ne, %36, %c0_i32_22 : i32
    scf.if %37 {
      %c0_23 = arith.constant 0 : index
      %c0_24 = arith.constant 0 : index
      %38 = vector.load %arg8[%c0_23, %c0_24] : memref<8x1xf32, #tpu.memory_space<vmem>>, vector<8x1xf32>
      %39 = tpu.reciprocal %38 {approx = true} : vector<8x1xf32> -> vector<8x1xf32>
      %c0_25 = arith.constant 0 : index
      %c0_26 = arith.constant 0 : index
      %40 = vector.load %arg9[%c0_25, %c0_26] : memref<8x128xf32, #tpu.memory_space<vmem>>, vector<8x128xf32>
      %41 = vector.broadcast %39 : vector<8x1xf32> to vector<8x128xf32>
      %42 = arith.mulf %40, %41 : vector<8x128xf32>
      %c0_27 = arith.constant 0 : index
      %c0_28 = arith.constant 0 : index
      %43 = vector.load %arg5[%c0_27, %c0_28] : memref<8x128xf32, #tpu.memory_space<vmem>>, vector<8x128xf32>
      tpu.vector_store %arg5[%c0_27, %c0_28], %42 {strides = array<i32>} : memref<8x128xf32, #tpu.memory_space<vmem>>, vector<8x128xf32>,
    } else {
    }
    return
  }
  func.func @transform_0(%arg0: i32, %arg1: i32) -> (i32, i32) {
    %c0_i32 = arith.constant 0 : i32
    %c0_i32_0 = arith.constant 0 : i32
    return %arg0, %c0_i32 : i32, i32
  }
  func.func @transform_1(%arg0: i32, %arg1: i32) -> (i32, i32) {
    %c0_i32 = arith.constant 0 : i32
    %c0_i32_0 = arith.constant 0 : i32
    return %arg1, %c0_i32 : i32, i32
  }
  func.func @transform_2(%arg0: i32, %arg1: i32) -> (i32, i32) {
    %c0_i32 = arith.constant 0 : i32
    %c0_i32_0 = arith.constant 0 : i32
    %c0_i32_1 = arith.constant 0 : i32
    return %c0_i32, %c0_i32_0 : i32, i32
  }
  func.func @transform_3(%arg0: i32, %arg1: i32) -> (i32, i32) {
    %c0_i32 = arith.constant 0 : i32
    %c0_i32_0 = arith.constant 0 : i32
    return %arg0, %c0_i32 : i32, i32
  }
}

</mosaic_0001>

<llo_original>
// kernel: tpu_custom_call.1
$region0: #{tpu_custom_call.1}
  #allocation0 [shape = 'u32[]', space=smem, size = 0x4, offset = 0x4, fixed_abs, tag = 'smem constant byte address 0x4 - core index']
  #allocation1 [shape = 'u32[72,128]{1,0:T(1,128)}', space=vmem, size = 0x9000, scoped, tag = 'internal scratch']
  #allocation2 [shape = 'bf16[8,128]{1,0:T(8,128)(2,1)}', space=vmem, size = 0x800, scoped, tag = 'scratch operand']
  #allocation3 [shape = 'f32[8,1]{1,0:T(8,128)}', space=vmem, size = 0x1000, scoped, tag = 'scratch operand']
  #allocation4 [shape = 'f32[8,1]{1,0:T(8,128)}', space=vmem, size = 0x1000, scoped, tag = 'scratch operand']
  #allocation5 [shape = 'f32[8,128]{1,0:T(8,128)}', space=vmem, size = 0x1000, scoped, tag = 'scratch operand']
  %s0 = inlined_call_operand.hbm [shape: bf16[8,128], index: 0, kind: input, shape index: {}]
  %s1 = inlined_call_operand.hbm [shape: bf16[8,128], index: 1, kind: input, shape index: {}]
  %s2 = inlined_call_operand.hbm [shape: bf16[128,384], index: 2, kind: input, shape index: {}]
  %s3 = inlined_call_operand.hbm [shape: f32[8,128], index: 3, kind: output, shape index: {}]
  %s4 = sld [smem:[#allocation0]]
  $region42: #{tpu_custom_call.1} parent=0
    _
  %s6 = ssub.s32 1, %s4
  %s7 = scalar_select 0, %s6, %s4
  $region1: #{tpu_custom_call.1} parent=0
    #allocation6 [shape = 'u8[2048]{0}', space=vmem, size = 0x800, scoped, tag = 'input window, operand 0, single buffered']
    #allocation7 [shape = 's32[1]{0}', space=sflag, size = 0x4, scoped, tag = 'scoped memory for tpu_custom_call.1']
    #allocation8 [shape = 's32[1]{0}', space=sflag, size = 0x4, scoped, tag = 'scoped memory for tpu_custom_call.1']
    #allocation9 [shape = 'u8[2048]{0}', space=vmem, size = 0x800, scoped, tag = 'input window, operand 1, single buffered']
    #allocation10 [shape = 's32[1]{0}', space=sflag, size = 0x4, scoped, tag = 'scoped memory for tpu_custom_call.1']
    #allocation11 [shape = 'u8[98304]{0}', space=vmem, size = 0x18000, scoped, tag = 'input window, operand 2, single buffered']
    #allocation12 [shape = 'u8[4096]{0}', space=vmem, size = 0x1000, scoped, tag = 'output window, operand 0, single buffered']
    %8 = vsyncpa [#allocation7], 0
    %9 = vsyncpa [#allocation10], 0
    %10 = vsyncpa [#allocation8], 0
    // Predicated region
    $region2: #{tpu_custom_call.1} parent=1 // pred_check
      _
    $region3: #{tpu_custom_call.1} parent=1 // pred_check_branch
      %12 = sbr.rel (0) target = $region5
    $region4: #{tpu_custom_call.1} parent=1 // pred_region
      %14 = vsyncadd [#allocation7], 0
      %s16 = sshll.u32 %s0, 4
      %s17 = int_to_ptr.hbm [resolvable:$true] %s16
      %s18 = sshll.u32 [#allocation6], 4
      %s19 = int_to_ptr.vmem [resolvable:$true] %s18
      %21 = dma.hbm_to_vmem [thread:$0]  %s17, 64, %s19, [#allocation7]
    $region5: #{tpu_custom_call.1} parent=1 // pred_fallthru
      _
    // Predicated region
    $region6: #{tpu_custom_call.1} parent=1 // pred_check
      _
    $region7: #{tpu_custom_call.1} parent=1 // pred_check_branch
      %23 = sbr.rel (0) target = $region9
    $region8: #{tpu_custom_call.1} parent=1 // pred_region
      %25 = vsyncadd [#allocation10], 0
      %s27 = sshll.u32 %s1, 4
      %s28 = int_to_ptr.hbm [resolvable:$true] %s27
      %s29 = sshll.u32 [#allocation9], 4
      %s30 = int_to_ptr.vmem [resolvable:$true] %s29
      %32 = dma.hbm_to_vmem [thread:$0]  %s28, 64, %s30, [#allocation10]
    $region9: #{tpu_custom_call.1} parent=1 // pred_fallthru
      _
    // Predicated region
    $region10: #{tpu_custom_call.1} parent=1 // pred_check
      _
    $region11: #{tpu_custom_call.1} parent=1 // pred_check_branch
      %34 = sbr.rel (0) target = $region13
    $region12: #{tpu_custom_call.1} parent=1 // pred_region
      %36 = vsyncadd [#allocation10], 0
      %s37 = sshll.u32 %s2, 4
      %s38 = int_to_ptr.hbm [resolvable:$true] %s37
      %s39 = sshll.u32 [#allocation11], 4
      %s40 = int_to_ptr.vmem [resolvable:$true] %s39
      %45 = dma.hbm_to_vmem [thread:$0]  %s38, 3072, %s40, [#allocation10], 192, 192, 12
    $region13: #{tpu_custom_call.1} parent=1 // pred_fallthru
      _
    // Predicated region
    $region14: #{tpu_custom_call.1} parent=1 // pred_check
      _
    $region15: #{tpu_custom_call.1} parent=1 // pred_check_branch
      %47 = sbr.rel (0) target = $region17
    $region16: #{tpu_custom_call.1} parent=1 // pred_region
      %49 = dma.done [#allocation7], 64
    $region17: #{tpu_custom_call.1} parent=1 // pred_fallthru
      _
    // Predicated region
    $region18: #{tpu_custom_call.1} parent=1 // pred_check
      _
    $region19: #{tpu_custom_call.1} parent=1 // pred_check_branch
      %51 = sbr.rel (0) target = $region21
    $region20: #{tpu_custom_call.1} parent=1 // pred_region
      %53 = dma.done [#allocation10], 64
    $region21: #{tpu_custom_call.1} parent=1 // pred_fallthru
      _
    // Predicated region
    $region22: #{tpu_custom_call.1} parent=1 // pred_check
      _
    $region23: #{tpu_custom_call.1} parent=1 // pred_check_branch
      %55 = sbr.rel (0) target = $region25
    $region24: #{tpu_custom_call.1} parent=1 // pred_region
      %57 = dma.done [#allocation10], 3072
    $region25: #{tpu_custom_call.1} parent=1 // pred_fallthru
      _
    %p59 = scmp.eq.s32.totalorder 0, 0
    // Predicated region
    $region26: #{tpu_custom_call.1} parent=1 // pred_check
      %p60 = pneg %p59
    $region27: #{tpu_custom_call.1} parent=1 // pred_check_branch
      %62 = sbr.rel (%p60) target = $region29
    $region28: #{tpu_custom_call.1} parent=1 // pred_region
      %v63 = vld [vmem:[#allocation6] sm:$0xf]
      %v64 = vld [vmem:[#allocation11] sm:$0xf]
      %v65 = vld [vmem:[#allocation11 + $0xc] sm:$0xf]
      %v66 = vld [vmem:[#allocation11 + $0x18] sm:$0xf]
      %v67 = vld [vmem:[#allocation11 + $0x24] sm:$0xf]
      %v68 = vld [vmem:[#allocation11 + $0x30] sm:$0xf]
      %v69 = vld [vmem:[#allocation11 + $0x3c] sm:$0xf]
      %v70 = vld [vmem:[#allocation11 + $0x48] sm:$0xf]
      %v71 = vld [vmem:[#allocation11 + $0x54] sm:$0xf]
      %v72 = vld [vmem:[#allocation11 + $0x60] sm:$0xf]
      %v73 = vld [vmem:[#allocation11 + $0x6c] sm:$0xf]
      %v74 = vld [vmem:[#allocation11 + $0x78] sm:$0xf]
      %v75 = vld [vmem:[#allocation11 + $0x84] sm:$0xf]
      %v76 = vld [vmem:[#allocation11 + $0x90] sm:$0xf]
      %v77 = vld [vmem:[#allocation11 + $0x9c] sm:$0xf]
      %v78 = vld [vmem:[#allocation11 + $0xa8] sm:$0xf]
      %v79 = vld [vmem:[#allocation11 + $0xb4] sm:$0xf]
      %v96 = vunpack.c.l.b16 %v64
      %v97 = vunpack.c.l.b16 %v65
      %v98 = vunpack.c.l.b16 %v66
      %v99 = vunpack.c.l.b16 %v67
      %v100 = vunpack.c.l.b16 %v68
      %v101 = vunpack.c.l.b16 %v69
      %v102 = vunpack.c.l.b16 %v70
      %v103 = vunpack.c.l.b16 %v71
      %v104 = vunpack.c.l.b16 %v72
      %v105 = vunpack.c.l.b16 %v73
      %v106 = vunpack.c.l.b16 %v74
      %v107 = vunpack.c.l.b16 %v75
      %v108 = vunpack.c.l.b16 %v76
      %v109 = vunpack.c.l.b16 %v77
      %v110 = vunpack.c.l.b16 %v78
      %v111 = vunpack.c.l.b16 %v79
      %v112 = vpack.c.b16 %v97, %v96
      %v113 = vpack.c.b16 %v99, %v98
      %v114 = vpack.c.b16 %v101, %v100
      %v115 = vpack.c.b16 %v103, %v102
      %v116 = vpack.c.b16 %v105, %v104
      %v117 = vpack.c.b16 %v107, %v106
      %v118 = vpack.c.b16 %v109, %v108
      %v119 = vpack.c.b16 %v111, %v110
      %128 = vmatpush.bf16.msra.mxu0 %v119
      %129 = vmatpush.bf16.msra.mxu0 %v118
      %130 = vmatpush.bf16.msra.mxu0 %v117
      %131 = vmatpush.bf16.msra.mxu0 %v116
      %132 = vmatpush.bf16.msra.mxu0 %v115
      %133 = vmatpush.bf16.msra.mxu0 %v114
      %134 = vmatpush.bf16.msra.mxu0 %v113
      %135 = vmatpush.bf16.msra.mxu0 %v112
      %136 = vmatmul.bf16.gmra.mxu0 %v63
      %v137 = vpop.f32.mrf.mxu0
      %v138 = vadd.f32 0.0, %v137
      %v139 = vpop.f32.mrf.mxu0
      %140 = vdwg.mxu0
      %v141 = vpack.c.bf16 %v138, %v138
      %142 = vst [vmem:[#allocation2] sm:$0xf] %v141
      %vm143 = vcmask 7168
      %144 = vst.msk [vmem:[#allocation3] sm:$0xff] %vm143, -inf
      %145 = vst.msk [vmem:[#allocation4] sm:$0xff] %vm143, 0.0
      %146 = vst [vmem:[#allocation5] sm:$0xff] 0.0
    $region29: #{tpu_custom_call.1} parent=1 // pred_fallthru
      _
    %v147 = vld [vmem:[#allocation9] sm:$0xf]
    %v148 = vld [vmem:[#allocation11 + $0x4] sm:$0xff]
    %v149 = vld [vmem:[#allocation11 + $0x10] sm:$0xff]
    %v150 = vld [vmem:[#allocation11 + $0x1c] sm:$0xff]
    %v151 = vld [vmem:[#allocation11 + $0x28] sm:$0xff]
    %v152 = vld [vmem:[#allocation11 + $0x34] sm:$0xff]
    %v153 = vld [vmem:[#allocation11 + $0x40] sm:$0xff]
    %v154 = vld [vmem:[#allocation11 + $0x4c] sm:$0xff]
    %v155 = vld [vmem:[#allocation11 + $0x58] sm:$0xff]
    %v156 = vld [vmem:[#allocation11 + $0x64] sm:$0xff]
    %v157 = vld [vmem:[#allocation11 + $0x70] sm:$0xff]
    %v158 = vld [vmem:[#allocation11 + $0x7c] sm:$0xff]
    %v159 = vld [vmem:[#allocation11 + $0x88] sm:$0xff]
    %v160 = vld [vmem:[#allocation11 + $0x94] sm:$0xff]
    %v161 = vld [vmem:[#allocation11 + $0xa0] sm:$0xff]
    %v162 = vld [vmem:[#allocation11 + $0xac] sm:$0xff]
    %v163 = vld [vmem:[#allocation11 + $0xb8] sm:$0xff]
    %v180 = vunpack.c.l.b16 %v148
    %v181 = vunpack.c.h.b16 %v148
    %v182 = vunpack.c.l.b16 %v149
    %v183 = vunpack.c.h.b16 %v149
    %v184 = vunpack.c.l.b16 %v150
    %v185 = vunpack.c.h.b16 %v150
    %v186 = vunpack.c.l.b16 %v151
    %v187 = vunpack.c.h.b16 %v151
    %v188 = vunpack.c.l.b16 %v152
    %v189 = vunpack.c.h.b16 %v152
    %v190 = vunpack.c.l.b16 %v153
    %v191 = vunpack.c.h.b16 %v153
    %v192 = vunpack.c.l.b16 %v154
    %v193 = vunpack.c.h.b16 %v154
    %v194 = vunpack.c.l.b16 %v155
    %v195 = vunpack.c.h.b16 %v155
    %v196 = vunpack.c.l.b16 %v156
    %v197 = vunpack.c.h.b16 %v156
    %v198 = vunpack.c.l.b16 %v157
    %v199 = vunpack.c.h.b16 %v157
    %v200 = vunpack.c.l.b16 %v158
    %v201 = vunpack.c.h.b16 %v158
    %v202 = vunpack.c.l.b16 %v159
    %v203 = vunpack.c.h.b16 %v159
    %v204 = vunpack.c.l.b16 %v160
    %v205 = vunpack.c.h.b16 %v160
    %v206 = vunpack.c.l.b16 %v161
    %v207 = vunpack.c.h.b16 %v161
    %v208 = vunpack.c.l.b16 %v162
    %v209 = vunpack.c.h.b16 %v162
    %v210 = vunpack.c.l.b16 %v163
    %v211 = vunpack.c.h.b16 %v163
    %v212 = vpack.c.b16 %v182, %v180
    %v213 = vpack.c.b16 %v183, %v181
    %v214 = vpack.c.b16 %v186, %v184
    %v215 = vpack.c.b16 %v187, %v185
    %v216 = vpack.c.b16 %v190, %v188
    %v217 = vpack.c.b16 %v191, %v189
    %v218 = vpack.c.b16 %v194, %v192
    %v219 = vpack.c.b16 %v195, %v193
    %v220 = vpack.c.b16 %v198, %v196
    %v221 = vpack.c.b16 %v199, %v197
    %v222 = vpack.c.b16 %v202, %v200
    %v223 = vpack.c.b16 %v203, %v201
    %v224 = vpack.c.b16 %v206, %v204
    %v225 = vpack.c.b16 %v207, %v205
    %v226 = vpack.c.b16 %v210, %v208
    %v227 = vpack.c.b16 %v211, %v209
    %244 = vmatpush.bf16.msra.mxu0 %v226
    %245 = vmatpush.bf16.msra.mxu0 %v224
    %246 = vmatpush.bf16.msra.mxu0 %v222
    %247 = vmatpush.bf16.msra.mxu0 %v220
    %248 = vmatpush.bf16.msra.mxu0 %v218
    %249 = vmatpush.bf16.msra.mxu0 %v216
    %250 = vmatpush.bf16.msra.mxu0 %v214
    %251 = vmatpush.bf16.msra.mxu0 %v212
    %252 = vmatmul.bf16.gmra.mxu0 %v147
    %v253 = vpop.f32.mrf.mxu0
    %v254 = vadd.f32 0.0, %v253
    %v255 = vpop.f32.mrf.mxu0
    %256 = vdwg.mxu0
    %257 = vmatpush.bf16.msra.mxu0 %v227
    %258 = vmatpush.bf16.msra.mxu0 %v225
    %259 = vmatpush.bf16.msra.mxu0 %v223
    %260 = vmatpush.bf16.msra.mxu0 %v221
    %261 = vmatpush.bf16.msra.mxu0 %v219
    %262 = vmatpush.bf16.msra.mxu0 %v217
    %263 = vmatpush.bf16.msra.mxu0 %v215
    %264 = vmatpush.bf16.msra.mxu0 %v213
    %265 = vmatmul.bf16.gmra.mxu0 %v147
    %v266 = vpop.f32.mrf.mxu0
    %v267 = vadd.f32 0.0, %v266
    %v268 = vpop.f32.mrf.mxu0
    %269 = vdwg.mxu0
    %v270 = vpack.c.bf16 %v254, %v254
    %v271 = vpack.c.bf16 %v267, %v267
    %v272 = vld [vmem:[#allocation2] sm:$0xf]
    %273 = vmatpush.bf16.xpose.msra.mxu0 0
    %274 = vmatpush.bf16.xpose.msra.mxu0 0
    %275 = vmatpush.bf16.xpose.msra.mxu0 0
    %276 = vmatpush.bf16.xpose.msra.mxu0 0
    %277 = vmatpush.bf16.xpose.msra.mxu0 0
    %278 = vmatpush.bf16.xpose.msra.mxu0 0
    %279 = vmatpush.bf16.xpose.msra.mxu0 0
    %280 = vmatpush.bf16.xpose.msra.mxu0 %v270
    %281 = vmatmul.bf16.gmra.mxu0 %v272
    %v282 = vpop.f32.mrf.mxu0
    %v283 = vadd.f32 0.0, %v282
    %v284 = vpop.f32.mrf.mxu0
    %285 = vdwg.mxu0
    %v286 = vld [vmem:[#allocation3] sm:$0xff]
    %vm287 = vcmask 64512
    %v288 = vsel %vm287, %v283, -inf
    %289 = vmax.xlane.f32.xlu0 %v288
    %v290 = vpop.xlane.xlu0 %289
    %v291 = vmax.f32 %v286, %v290
    %v292 = vsub.f32 %v286, %v291
    %v293 = vmul.f32 %v292, 1.442695
    %v294 = vpow.pop %v293
    %296 = vset.pattern.permute.xlu0 0
    %297 = vperm.xlu0 %296, %v291
    %v298 = vpop.permute.xlu0 %297
    %v300 = vsub.f32 %v283, %v298
    %v301 = vmul.f32 %v300, 1.442695
    %v302 = vpow.pop %v301
    %v303 = vld [vmem:[#allocation4] sm:$0xff]
    %v304 = vmul.f32 %v294, %v303
    %v305 = vsel %vm287, %v302, 0.0
    %306 = vadd.xlane.f32.xlu0 %v305
    %v307 = vpop.xlane.xlu0 %306
    %v308 = vadd.f32 %v304, %v307
    %vm309 = vcmask 7168
    %310 = vst.msk [vmem:[#allocation4] sm:$0xff] %vm309, %v308
    %v311 = vld [vmem:[#allocation5] sm:$0xff]
    %313 = vset.pattern.permute.xlu0 0
    %314 = vperm.xlu0 %313, %v294
    %v315 = vpop.permute.xlu0 %314
    %v317 = vmul.f32 %v315, %v311
    %v318 = vpack.c.bf16 %v302, %v302
    %v320 = vsel %vm287, %v318, 0
    %vm322 = vcmask 1043456
    %v324 = vsel %vm322, %v271, 0
    %326 = vmatpush.bf16.msra.mxu0 0
    %327 = vmatpush.bf16.msra.mxu0 0
    %328 = vmatpush.bf16.msra.mxu0 0
    %329 = vmatpush.bf16.msra.mxu0 0
    %330 = vmatpush.bf16.msra.mxu0 0
    %331 = vmatpush.bf16.msra.mxu0 0
    %332 = vmatpush.bf16.msra.mxu0 0
    %333 = vmatpush.bf16.msra.mxu0 %v324
    %334 = vmatmul.bf16.gmra.mxu0 %v320
    %v335 = vpop.f32.mrf.mxu0
    %v336 = vadd.f32 0.0, %v335
    %v337 = vpop.f32.mrf.mxu0
    %338 = vdwg.mxu0
    %v339 = vadd.f32 %v317, %v336
    %340 = vst [vmem:[#allocation5] sm:$0xff] %v339
    %341 = vst.msk [vmem:[#allocation3] sm:$0xff] %vm309, %v291
    // Predicated region
    $region30: #{tpu_custom_call.1} parent=1 // pred_check
      %p342 = pneg %p59
    $region31: #{tpu_custom_call.1} parent=1 // pred_check_branch
      %344 = sbr.rel (%p342) target = $region33
    $region32: #{tpu_custom_call.1} parent=1 // pred_region
      %v345 = vld [vmem:[#allocation4] sm:$0xff]
      %v346 = vrcp.pop %v345
      %v347 = vld [vmem:[#allocation5] sm:$0xff]
      %349 = vset.pattern.permute.xlu0 0
      %350 = vperm.xlu0 %349, %v346
      %v351 = vpop.permute.xlu0 %350
      %v353 = vmul.f32 %v347, %v351
      %354 = vst [vmem:[#allocation12] sm:$0xff] %v353
    $region33: #{tpu_custom_call.1} parent=1 // pred_fallthru
      _
    // Predicated region
    $region34: #{tpu_custom_call.1} parent=1 // pred_check
      _
    $region35: #{tpu_custom_call.1} parent=1 // pred_check_branch
      %356 = sbr.rel (0) target = $region37
    $region36: #{tpu_custom_call.1} parent=1 // pred_region
      %358 = vsyncadd [#allocation8], 0
      %s360 = sshll.u32 [#allocation12], 4
      %s361 = int_to_ptr.vmem [resolvable:$true] %s360
      %s362 = sshll.u32 %s3, 4
      %s363 = int_to_ptr.hbm [resolvable:$true] %s362
      %365 = dma.vmem_to_hbm [thread:$0]  %s361, 128, %s363, [#allocation8]
    $region37: #{tpu_custom_call.1} parent=1 // pred_fallthru
      _
    // Predicated region
    $region38: #{tpu_custom_call.1} parent=1 // pred_check
      _
    $region39: #{tpu_custom_call.1} parent=1 // pred_check_branch
      %367 = sbr.rel (0) target = $region41
    $region40: #{tpu_custom_call.1} parent=1 // pred_region
      %369 = dma.done [#allocation8], 128
    $region41: #{tpu_custom_call.1} parent=1 // pred_fallthru
      _
    %370 = vsyncpa [#allocation7], 1
    %371 = vsyncpa [#allocation10], 1
    %372 = vsyncpa [#allocation8], 1

</llo_original>
